<compile_context>
chip_gen: v5e
topology: v5e:2x2
jax: 0.10.0
libtpu: 0.0.40
codegen_flags: <defaults>
</compile_context>

<pallas_src>
import functools

import jax
import jax.numpy as jnp
import numpy as np
from jax import lax
from jax.experimental import pallas as pl
from jax.experimental.pallas import tpu as pltpu


def _round_up(x, m):
    return (x + m - 1) // m * m


def _dense_layer_kernel(x_ref, scale_ref, shift_ref, w_ref, mask_ref,
                        out_ref, a_ext_ref, *, W, C_pad):
    # x_ref:     (1, C, HW)        one batch element, NCHW flattened over (H, W)
    # scale_ref: (C, 1)            folded BN scale = gamma / sqrt(var + eps)
    # shift_ref: (C, 1)            folded BN shift = beta - mean * scale
    # w_ref:     (Cout, 9*C_pad)   conv weights, K ordered (ky, kx, c_pad)
    # mask_ref:  (3, HW)           horizontal-validity lane mask per dx
    # out_ref:   (1, C+Cout, HW)   concatenated output block (x then conv out)
    # a_ext_ref: (C_pad, HW+2*PAD) zero-extended activation row, PAD = W + 1
    C = x_ref.shape[1]
    HW = x_ref.shape[2]
    PAD = W + 1

    x = x_ref[0]                                            # (C, HW) f32

    # Folded inference BatchNorm + ReLU (elementwise, f32, VPU).
    a = jnp.maximum(x * scale_ref[...] + shift_ref[...], 0.0)

    # Pad channels up to the sublane tile and add PAD zero lanes on each side
    # (absorbs the row +/- 1 vertical out-of-bounds taps).  Built as a value
    # and written with a single full-block, aligned store.
    if C_pad > C:
        a = jnp.concatenate(
            [a, jnp.zeros((C_pad - C, HW), jnp.float32)], axis=0)
    zpad = jnp.zeros((C_pad, PAD), jnp.float32)
    a_ext_ref[...] = jnp.concatenate([zpad, a, zpad], axis=1)

    # im2col: tap t = ky*3 + kx reads flat lane offset (ky-1)*W + (kx-1).
    # Horizontal out-of-bounds taps are killed by the per-dx lane mask.
    cols = []
    for t in range(9):
        dy, dx = t // 3 - 1, t % 3 - 1
        start = PAD + dy * W + dx                           # static offset
        blk = a_ext_ref[:, start:start + HW]                # (C_pad, HW)
        m = mask_ref[dx + 1:dx + 2, :]                      # (1, HW)
        cols.append(blk * m)
    col_mat = jnp.concatenate(cols, axis=0)                 # (9*C_pad, HW)

    # One MXU matmul: (Cout, 9*C_pad) x (9*C_pad, HW) -> (Cout, HW), f32 acc.
    acc = jnp.dot(w_ref[...], col_mat, preferred_element_type=jnp.float32)

    # Concatenated output block (original x channels, then conv channels),
    # written with one full-block lane-dense store.
    out_ref[0] = jnp.concatenate([x, acc.astype(x.dtype)], axis=0)


def dense_layer(x_nchw, gamma, beta, running_mean, running_var, conv_weight,
                eps=1e-5):
    """DenseLayer forward.
    x_nchw: (N, C, H, W) f32; conv_weight: (Cout, C, 3, 3) f32 (PyTorch OIHW).
    Returns (N, C+Cout, H, W) = cat([x, conv(relu(bn(x)))], dim=1)."""
    N, C, H, W = x_nchw.shape
    Cout = conv_weight.shape[0]
    HW = H * W
    C_pad = _round_up(C, 8)

    # Fold BN (inference mode) into per-channel scale / shift (wrapper glue).
    scale = (gamma / jnp.sqrt(running_var + eps)).astype(jnp.float32)
    shift = (beta - running_mean * scale).astype(jnp.float32)

    # Lane-dense view: NCHW -> (N, C, H*W) is a free reshape (no transpose).
    x_flat = x_nchw.reshape(N, C, HW)

    # OIHW -> (Cout, 9*C_pad), K ordered (ky, kx, c_pad); padded channels = 0.
    w = jnp.transpose(conv_weight, (0, 2, 3, 1))            # (Cout, 3, 3, C)
    w = jnp.pad(w, ((0, 0), (0, 0), (0, 0), (0, C_pad - C)))
    w2 = w.reshape(Cout, 9 * C_pad).astype(jnp.float32)

    # Static per-dx horizontal-validity lane mask (numpy constant, dx=-1,0,+1).
    col = np.arange(HW) % W
    mask_np = np.stack(
        [((col + dx >= 0) & (col + dx < W)).astype(np.float32)
         for dx in (-1, 0, 1)], axis=0)                      # (3, HW)
    mask = jnp.asarray(mask_np)

    kernel = functools.partial(_dense_layer_kernel, W=W, C_pad=C_pad)

    out_flat = pl.pallas_call(
        kernel,
        out_shape=jax.ShapeDtypeStruct((N, C + Cout, HW), x_flat.dtype),
        grid_spec=pltpu.PrefetchScalarGridSpec(
            num_scalar_prefetch=0,
            # One batch element per step: cheap serial loop on v5e/v6e,
            # megacore-split across TensorCores on v7x.
            grid=(N,),
            in_specs=[
                pl.BlockSpec((1, C, HW), lambda n: (n, 0, 0)),
                pl.BlockSpec((C, 1), lambda n: (0, 0)),
                pl.BlockSpec((C, 1), lambda n: (0, 0)),
                pl.BlockSpec((Cout, 9 * C_pad), lambda n: (0, 0)),
                pl.BlockSpec((3, HW), lambda n: (0, 0)),
            ],
            out_specs=pl.BlockSpec((1, C + Cout, HW), lambda n: (n, 0, 0)),
            scratch_shapes=[
                pltpu.VMEM((C_pad, HW + 2 * (W + 1)), jnp.float32),
            ],
        ),
        compiler_params=pltpu.CompilerParams(
            dimension_semantics=("parallel",)),
    )(x_flat, scale.reshape(C, 1), shift.reshape(C, 1), w2, mask)

    # Free reshape back to NCHW; the channel concat was done inside the kernel.
    return out_flat.reshape(N, C + Cout, H, W)


def _reference(x_nchw, gamma, beta, running_mean, running_var, conv_weight,
               eps=1e-5):
    g = gamma[None, :, None, None]
    b = beta[None, :, None, None]
    m = running_mean[None, :, None, None]
    v = running_var[None, :, None, None]
    a = jnp.maximum((x_nchw - m) / jnp.sqrt(v + eps) * g + b, 0.0)
    out = lax.conv_general_dilated(
        a, conv_weight, window_strides=(1, 1), padding="SAME",
        dimension_numbers=("NCHW", "OIHW", "NCHW"))
    return jnp.concatenate([x_nchw, out], axis=1)


if __name__ == "__main__":
    key = jax.random.PRNGKey(0)
    N, C, H, W = 2, 4, 16, 16      # in_channels = 4
    growth_rate = 8                # growth_rate = 8

    k = jax.random.split(key, 6)
    x = jax.random.normal(k[0], (N, C, H, W), dtype=jnp.float32)
    gamma = jax.random.uniform(k[1], (C,), jnp.float32, 0.5, 1.5)
    beta = jax.random.normal(k[2], (C,), jnp.float32) * 0.1
    running_mean = jax.random.normal(k[3], (C,), jnp.float32) * 0.1
    running_var = jax.random.uniform(k[4], (C,), jnp.float32, 0.5, 1.5)
    conv_weight = jax.random.normal(k[5], (growth_rate, C, 3, 3),
                                    dtype=jnp.float32) * 0.1

    # TODO(synk): BatchNorm is implemented in inference mode (running stats);
    # training-mode batch statistics / running-stat updates are not ported.
    out = dense_layer(x, gamma, beta, running_mean, running_var, conv_weight)
    out = jax.block_until_ready(out)

    ref = jax.block_until_ready(
        _reference(x, gamma, beta, running_mean, running_var, conv_weight))

    assert out.shape == (N, C + growth_rate, H, W)
    assert np.allclose(np.asarray(out), np.asarray(ref), atol=1e-4, rtol=1e-4)
    print("KERNEL_OK")
</pallas_src>

<mosaic_0001>
module attributes {stable_mosaic.version = 11 : i64} {
  func.func @_dense_layer_kernel(%arg0: i32, %arg1: memref<1x4x256xf32, #tpu.memory_space<vmem>>, %arg2: memref<4x1xf32, #tpu.memory_space<vmem>>, %arg3: memref<4x1xf32, #tpu.memory_space<vmem>>, %arg4: memref<8x72xf32, #tpu.memory_space<vmem>>, %arg5: memref<3x256xf32, #tpu.memory_space<vmem>>, %arg6: memref<1x12x256xf32, #tpu.memory_space<vmem>>, %arg7: memref<8x290xf32, #tpu.memory_space<vmem>>) attributes {dimension_semantics = [#tpu.dimension_semantics<parallel>], iteration_bounds = array<i64: 2>, scalar_prefetch = 0 : i64, scratch_operands = 1 : i64, tpu.core_type = #tpu.core_type<tc>, window_params = [{transform_indices = @transform_0, window_bounds = array<i64: 1, 4, 256>}, {pipeline_mode = #tpu.pipeline_mode<synchronous>, transform_indices = @transform_1, window_bounds = array<i64: 4, 1>}, {pipeline_mode = #tpu.pipeline_mode<synchronous>, transform_indices = @transform_2, window_bounds = array<i64: 4, 1>}, {pipeline_mode = #tpu.pipeline_mode<synchronous>, transform_indices = @transform_3, window_bounds = array<i64: 8, 72>}, {pipeline_mode = #tpu.pipeline_mode<synchronous>, transform_indices = @transform_4, window_bounds = array<i64: 3, 256>}, {transform_indices = @transform_5, window_bounds = array<i64: 1, 12, 256>}]} {
    %c0 = arith.constant 0 : index
    %c0_0 = arith.constant 0 : index
    %c0_1 = arith.constant 0 : index
    %0 = vector.load %arg1[%c0, %c0_0, %c0_1] : memref<1x4x256xf32, #tpu.memory_space<vmem>>, vector<1x4x256xf32>
    %1 = vector.shape_cast %0 : vector<1x4x256xf32> to vector<4x256xf32>
    %c0_2 = arith.constant 0 : index
    %c0_3 = arith.constant 0 : index
    %2 = vector.load %arg2[%c0_2, %c0_3] : memref<4x1xf32, #tpu.memory_space<vmem>>, vector<4x1xf32>
    %3 = vector.broadcast %2 : vector<4x1xf32> to vector<4x256xf32>
    %4 = arith.mulf %1, %3 : vector<4x256xf32>
    %c0_4 = arith.constant 0 : index
    %c0_5 = arith.constant 0 : index
    %5 = vector.load %arg3[%c0_4, %c0_5] : memref<4x1xf32, #tpu.memory_space<vmem>>, vector<4x1xf32>
    %6 = vector.broadcast %5 : vector<4x1xf32> to vector<4x256xf32>
    %7 = arith.addf %4, %6 : vector<4x256xf32>
    %cst = arith.constant 0.000000e+00 : f32
    %8 = vector.broadcast %cst : f32 to vector<4x256xf32>
    %9 = arith.maximumf %7, %8 : vector<4x256xf32>
    %cst_6 = arith.constant 0.000000e+00 : f32
    %10 = vector.broadcast %cst_6 : f32 to vector<4x256xf32>
    %11 = tpu.concatenate %9, %10 in 0 : vector<4x256xf32>, vector<4x256xf32> -> vector<8x256xf32>
    %cst_7 = arith.constant 0.000000e+00 : f32
    %12 = vector.broadcast %cst_7 : f32 to vector<8x17xf32>
    %13 = tpu.concatenate %12, %11, %12 in 1 : vector<8x17xf32>, vector<8x256xf32>, vector<8x17xf32> -> vector<8x290xf32>
    %c0_8 = arith.constant 0 : index
    %c0_9 = arith.constant 0 : index
    %14 = vector.load %arg7[%c0_8, %c0_9] : memref<8x290xf32, #tpu.memory_space<vmem>>, vector<8x290xf32>
    tpu.vector_store %arg7[%c0_8, %c0_9], %13 {strides = array<i32>} : memref<8x290xf32, #tpu.memory_space<vmem>>, vector<8x290xf32>,
    %c0_10 = arith.constant 0 : index
    %c0_11 = arith.constant 0 : index
    %15 = vector.load %arg7[%c0_10, %c0_11] : memref<8x290xf32, #tpu.memory_space<vmem>>, vector<8x256xf32>
    %c0_12 = arith.constant 0 : index
    %c0_13 = arith.constant 0 : index
    %16 = vector.load %arg5[%c0_12, %c0_13] : memref<3x256xf32, #tpu.memory_space<vmem>>, vector<1x256xf32>
    %17 = vector.broadcast %16 : vector<1x256xf32> to vector<8x256xf32>
    %18 = arith.mulf %15, %17 : vector<8x256xf32>
    %c0_14 = arith.constant 0 : index
    %c1 = arith.constant 1 : index
    %19 = vector.load %arg7[%c0_14, %c1] : memref<8x290xf32, #tpu.memory_space<vmem>>, vector<8x256xf32>
    %c1_15 = arith.constant 1 : index
    %c0_16 = arith.constant 0 : index
    %20 = vector.load %arg5[%c1_15, %c0_16] : memref<3x256xf32, #tpu.memory_space<vmem>>, vector<1x256xf32>
    %21 = vector.broadcast %20 : vector<1x256xf32> to vector<8x256xf32>
    %22 = arith.mulf %19, %21 : vector<8x256xf32>
    %c0_17 = arith.constant 0 : index
    %c2 = arith.constant 2 : index
    %23 = vector.load %arg7[%c0_17, %c2] : memref<8x290xf32, #tpu.memory_space<vmem>>, vector<8x256xf32>
    %c2_18 = arith.constant 2 : index
    %c0_19 = arith.constant 0 : index
    %24 = vector.load %arg5[%c2_18, %c0_19] : memref<3x256xf32, #tpu.memory_space<vmem>>, vector<1x256xf32>
    %25 = vector.broadcast %24 : vector<1x256xf32> to vector<8x256xf32>
    %26 = arith.mulf %23, %25 : vector<8x256xf32>
    %c0_20 = arith.constant 0 : index
    %c16 = arith.constant 16 : index
    %27 = vector.load %arg7[%c0_20, %c16] : memref<8x290xf32, #tpu.memory_space<vmem>>, vector<8x256xf32>
    %c0_21 = arith.constant 0 : index
    %c0_22 = arith.constant 0 : index
    %28 = vector.load %arg5[%c0_21, %c0_22] : memref<3x256xf32, #tpu.memory_space<vmem>>, vector<1x256xf32>
    %29 = vector.broadcast %28 : vector<1x256xf32> to vector<8x256xf32>
    %30 = arith.mulf %27, %29 : vector<8x256xf32>
    %c0_23 = arith.constant 0 : index
    %c17 = arith.constant 17 : index
    %31 = vector.load %arg7[%c0_23, %c17] : memref<8x290xf32, #tpu.memory_space<vmem>>, vector<8x256xf32>
    %c1_24 = arith.constant 1 : index
    %c0_25 = arith.constant 0 : index
    %32 = vector.load %arg5[%c1_24, %c0_25] : memref<3x256xf32, #tpu.memory_space<vmem>>, vector<1x256xf32>
    %33 = vector.broadcast %32 : vector<1x256xf32> to vector<8x256xf32>
    %34 = arith.mulf %31, %33 : vector<8x256xf32>
    %c0_26 = arith.constant 0 : index
    %c18 = arith.constant 18 : index
    %35 = vector.load %arg7[%c0_26, %c18] : memref<8x290xf32, #tpu.memory_space<vmem>>, vector<8x256xf32>
    %c2_27 = arith.constant 2 : index
    %c0_28 = arith.constant 0 : index
    %36 = vector.load %arg5[%c2_27, %c0_28] : memref<3x256xf32, #tpu.memory_space<vmem>>, vector<1x256xf32>
    %37 = vector.broadcast %36 : vector<1x256xf32> to vector<8x256xf32>
    %38 = arith.mulf %35, %37 : vector<8x256xf32>
    %c0_29 = arith.constant 0 : index
    %c32 = arith.constant 32 : index
    %39 = vector.load %arg7[%c0_29, %c32] : memref<8x290xf32, #tpu.memory_space<vmem>>, vector<8x256xf32>
    %c0_30 = arith.constant 0 : index
    %c0_31 = arith.constant 0 : index
    %40 = vector.load %arg5[%c0_30, %c0_31] : memref<3x256xf32, #tpu.memory_space<vmem>>, vector<1x256xf32>
    %41 = vector.broadcast %40 : vector<1x256xf32> to vector<8x256xf32>
    %42 = arith.mulf %39, %41 : vector<8x256xf32>
    %c0_32 = arith.constant 0 : index
    %c33 = arith.constant 33 : index
    %43 = vector.load %arg7[%c0_32, %c33] : memref<8x290xf32, #tpu.memory_space<vmem>>, vector<8x256xf32>
    %c1_33 = arith.constant 1 : index
    %c0_34 = arith.constant 0 : index
    %44 = vector.load %arg5[%c1_33, %c0_34] : memref<3x256xf32, #tpu.memory_space<vmem>>, vector<1x256xf32>
    %45 = vector.broadcast %44 : vector<1x256xf32> to vector<8x256xf32>
    %46 = arith.mulf %43, %45 : vector<8x256xf32>
    %c0_35 = arith.constant 0 : index
    %c34 = arith.constant 34 : index
    %47 = vector.load %arg7[%c0_35, %c34] : memref<8x290xf32, #tpu.memory_space<vmem>>, vector<8x256xf32>
    %c2_36 = arith.constant 2 : index
    %c0_37 = arith.constant 0 : index
    %48 = vector.load %arg5[%c2_36, %c0_37] : memref<3x256xf32, #tpu.memory_space<vmem>>, vector<1x256xf32>
    %49 = vector.broadcast %48 : vector<1x256xf32> to vector<8x256xf32>
    %50 = arith.mulf %47, %49 : vector<8x256xf32>
    %51 = tpu.concatenate %18, %22, %26, %30, %34, %38, %42, %46, %50 in 0 : vector<8x256xf32>, vector<8x256xf32>, vector<8x256xf32>, vector<8x256xf32>, vector<8x256xf32>, vector<8x256xf32>, vector<8x256xf32>, vector<8x256xf32>, vector<8x256xf32> -> vector<72x256xf32>
    %c0_38 = arith.constant 0 : index
    %c0_39 = arith.constant 0 : index
    %52 = vector.load %arg4[%c0_38, %c0_39] : memref<8x72xf32, #tpu.memory_space<vmem>>, vector<8x72xf32>
    %cst_40 = arith.constant dense<0.000000e+00> : vector<8x256xf32>
    %53 = tpu.matmul %52, %51, %cst_40 {dimension_numbers = #tpu.dot_dimension_numbers<[1], [0], [0], [1], [0, 0, 1, 1], [], []>} : vector<8x72xf32>, vector<72x256xf32>, vector<8x256xf32> -> vector<8x256xf32>
    %54 = tpu.concatenate %1, %53 in 0 : vector<4x256xf32>, vector<8x256xf32> -> vector<12x256xf32>
    %c0_41 = arith.constant 0 : index
    %c0_42 = arith.constant 0 : index
    %c0_43 = arith.constant 0 : index
    %55 = vector.load %arg6[%c0_41, %c0_42, %c0_43] : memref<1x12x256xf32, #tpu.memory_space<vmem>>, vector<1x12x256xf32>
    %56 = vector.shape_cast %55 : vector<1x12x256xf32> to vector<12x256xf32>
    %57 = vector.shape_cast %54 : vector<12x256xf32> to vector<1x12x256xf32>
    tpu.vector_store %arg6[%c0_41, %c0_42, %c0_43], %57 {strides = array<i32>} : memref<1x12x256xf32, #tpu.memory_space<vmem>>, vector<1x12x256xf32>,
    return
  }
  func.func @transform_0(%arg0: i32) -> (i32, i32, i32) {
    %c0_i32 = arith.constant 0 : i32
    %c0_i32_0 = arith.constant 0 : i32
    %c0_i32_1 = arith.constant 0 : i32
    return %arg0, %c0_i32, %c0_i32_0 : i32, i32, i32
  }
  func.func @transform_1(%arg0: i32) -> (i32, i32) {
    %c0_i32 = arith.constant 0 : i32
    %c0_i32_0 = arith.constant 0 : i32
    %c0_i32_1 = arith.constant 0 : i32
    return %c0_i32, %c0_i32_0 : i32, i32
  }
  func.func @transform_2(%arg0: i32) -> (i32, i32) {
    %c0_i32 = arith.constant 0 : i32
    %c0_i32_0 = arith.constant 0 : i32
    %c0_i32_1 = arith.constant 0 : i32
    return %c0_i32, %c0_i32_0 : i32, i32
  }
  func.func @transform_3(%arg0: i32) -> (i32, i32) {
    %c0_i32 = arith.constant 0 : i32
    %c0_i32_0 = arith.constant 0 : i32
    %c0_i32_1 = arith.constant 0 : i32
    return %c0_i32, %c0_i32_0 : i32, i32
  }
  func.func @transform_4(%arg0: i32) -> (i32, i32) {
    %c0_i32 = arith.constant 0 : i32
    %c0_i32_0 = arith.constant 0 : i32
    %c0_i32_1 = arith.constant 0 : i32
    return %c0_i32, %c0_i32_0 : i32, i32
  }
  func.func @transform_5(%arg0: i32) -> (i32, i32, i32) {
    %c0_i32 = arith.constant 0 : i32
    %c0_i32_0 = arith.constant 0 : i32
    %c0_i32_1 = arith.constant 0 : i32
    return %arg0, %c0_i32, %c0_i32_0 : i32, i32, i32
  }
}

</mosaic_0001>

<llo_original>
// kernel: tpu_custom_call.1
$region0: #{tpu_custom_call.1}
  #allocation0 [shape = 'u32[]', space=smem, size = 0x4, offset = 0x4, fixed_abs, tag = 'smem constant byte address 0x4 - core index']
  #allocation1 [shape = 'u32[72,128]{1,0:T(1,128)}', space=vmem, size = 0x9000, scoped, tag = 'internal scratch']
  #allocation2 [shape = 'f32[8,290]{1,0:T(8,128)}', space=vmem, size = 0x3000, scoped, tag = 'scratch operand']
  %s0 = inlined_call_operand.hbm [shape: f32[2,4,256], index: 0, kind: input, shape index: {}]
  %s1 = inlined_call_operand.vmem [shape: f32[4,1], index: 1, kind: input, shape index: {}]
  %s2 = inlined_call_operand.vmem [shape: f32[4,1], index: 2, kind: input, shape index: {}]
  %s3 = inlined_call_operand.vmem [shape: f32[8,72], index: 3, kind: input, shape index: {}]
  %s4 = inlined_call_operand.hbm [shape: f32[3,256], index: 4, kind: input, shape index: {}]
  %s5 = inlined_call_operand.vmem [shape: f32[2,12,256], index: 5, kind: output, shape index: {}]
  %s6 = sld [smem:[#allocation0]]
  $region61: #{tpu_custom_call.1} parent=0
    _
  %s8 = ssub.s32 1, %s6
  %s9 = scalar_select 0, %s8, %s6
  $region1: #{tpu_custom_call.1} parent=0
    #allocation3 [shape = 'u8[8192]{0}', space=vmem, size = 0x2000, scoped, tag = 'input window, operand 0']
    #allocation4 [shape = 's32[2]{0}', space=sflag, size = 0x8, scoped, tag = 'scoped memory for tpu_custom_call.1']
    #allocation5 [shape = 'u8[4096]{0}', space=vmem, size = 0x1000, scoped, tag = 'input window, operand 4, single buffered']
    #allocation6 [shape = 's32[1]{0}', space=sflag, size = 0x4, scoped, tag = 'scoped memory for tpu_custom_call.1']
    %10 = vsyncpa [#allocation4], 0
    %s11 = scalar_lea.sflag [#allocation4], 1
    %12 = vsyncpa %s11, 0
    %13 = vsyncpa [#allocation6], 0
    loop: start=0, step=1, limit=4
    $region2: #{tpu_custom_call.1} parent=1 // loop_pre_header
      _
    $region3: #{tpu_custom_call.1} parent=1 // loop_header
      %s15 = sphi 0, %s19
      %p16 = scmp.ge.s32.totalorder %s15, 4
      %s25 = sphi 0, %s27
      %s28 = sphi 0, %s25
      %s29 = sphi 0, %s28
      %s45 = sphi 0, %s29
      %s49 = sphi 0, %s49
      %s51 = sphi 0, %s49
      %s52 = sphi 0, %s51
      %s66 = sphi 0, %s52
      %s70 = sphi 0, %s70
      %s72 = sphi 0, %s70
      %s73 = sphi 0, %s72
      %s87 = sphi 0, %s73
      %s91 = sphi 0, %s91
      %s93 = sphi 0, %s91
      %s94 = sphi 0, %s93
      %s108 = sphi 0, %s94
      %s112 = sphi 0, %s112
      %s114 = sphi 0, %s112
      %s115 = sphi 0, %s114
      %s129 = sphi 0, %s115
      %s135 = sphi 0, %s137
      %s138 = sphi 0, %s135
      %s139 = sphi 0, %s138
      %s155 = sphi 0, %s139
    $region4: #{tpu_custom_call.1} parent=1 // loop_header_branch
      %18 = sbr.rel (%p16) target = $region8
    $region5: #{tpu_custom_call.1} parent=1 // loop_body
      %s20 = ssub.s32 %s15, 1
      %s21 = ssub.s32 %s15, 2
      %s22 = sadd.s32 %s15, 1
      %s23 = ssub.s32 %s15, %s22
      %p24 = scmp.eq.s32.totalorder %s23, 0
      %s26 = sadd.s32 %s25, 1
      %s27 = scalar_select %p24, %s25, %s26
      %p30 = pneg %p24
      %p31 = scmp.eq.s32.totalorder %s15, 1
      %p32 = por %p30, %p31
      %p33 = scmp.ne.s32.totalorder %s25, %s28
      %p34 = scmp.eq.s32.totalorder %s15, 0
      %p35 = por %p33, %p34
      %p36 = scmp.ne.s32.totalorder %s25, %s28
      %p37 = scmp.eq.s32.totalorder %s20, 1
      %p38 = por %p36, %p37
      %p39 = scmp.ne.s32.totalorder %s28, %s29
      %p40 = scmp.eq.s32.totalorder %s20, 0
      %p41 = por %p39, %p40
      %p42 = scmp.ne.s32.totalorder %s28, %s29
      %p43 = scmp.eq.s32.totalorder %s21, 1
      %p44 = por %p42, %p43
      %p46 = scmp.ne.s32.totalorder %s29, %s45
      %p47 = scmp.eq.s32.totalorder %s21, 0
      %p48 = por %p46, %p47
      %s50 = sadd.s32 %s49, 1
      %p53 = scmp.eq.s32.totalorder %s15, 1
      %p54 = scmp.ne.s32.totalorder %s49, %s51
      %p55 = scmp.eq.s32.totalorder %s15, 0
      %p56 = por %p54, %p55
      %p57 = scmp.ne.s32.totalorder %s49, %s51
      %p58 = scmp.eq.s32.totalorder %s20, 1
      %p59 = por %p57, %p58
      %p60 = scmp.ne.s32.totalorder %s51, %s52
      %p61 = scmp.eq.s32.totalorder %s20, 0
      %p62 = por %p60, %p61
      %p63 = scmp.ne.s32.totalorder %s51, %s52
      %p64 = scmp.eq.s32.totalorder %s21, 1
      %p65 = por %p63, %p64
      %p67 = scmp.ne.s32.totalorder %s52, %s66
      %p68 = scmp.eq.s32.totalorder %s21, 0
      %p69 = por %p67, %p68
      %s71 = sadd.s32 %s70, 1
      %p74 = scmp.eq.s32.totalorder %s15, 1
      %p75 = scmp.ne.s32.totalorder %s70, %s72
      %p76 = scmp.eq.s32.totalorder %s15, 0
      %p77 = por %p75, %p76
      %p78 = scmp.ne.s32.totalorder %s70, %s72
      %p79 = scmp.eq.s32.totalorder %s20, 1
      %p80 = por %p78, %p79
      %p81 = scmp.ne.s32.totalorder %s72, %s73
      %p82 = scmp.eq.s32.totalorder %s20, 0
      %p83 = por %p81, %p82
      %p84 = scmp.ne.s32.totalorder %s72, %s73
      %p85 = scmp.eq.s32.totalorder %s21, 1
      %p86 = por %p84, %p85
      %p88 = scmp.ne.s32.totalorder %s73, %s87
      %p89 = scmp.eq.s32.totalorder %s21, 0
      %p90 = por %p88, %p89
      %s92 = sadd.s32 %s91, 1
      %p95 = scmp.eq.s32.totalorder %s15, 1
      %p96 = scmp.ne.s32.totalorder %s91, %s93
      %p97 = scmp.eq.s32.totalorder %s15, 0
      %p98 = por %p96, %p97
      %p99 = scmp.ne.s32.totalorder %s91, %s93
      %p100 = scmp.eq.s32.totalorder %s20, 1
      %p101 = por %p99, %p100
      %p102 = scmp.ne.s32.totalorder %s93, %s94
      %p103 = scmp.eq.s32.totalorder %s20, 0
      %p104 = por %p102, %p103
      %p105 = scmp.ne.s32.totalorder %s93, %s94
      %p106 = scmp.eq.s32.totalorder %s21, 1
      %p107 = por %p105, %p106
      %p109 = scmp.ne.s32.totalorder %s94, %s108
      %p110 = scmp.eq.s32.totalorder %s21, 0
      %p111 = por %p109, %p110
      %s113 = sadd.s32 %s112, 1
      %p116 = scmp.eq.s32.totalorder %s15, 1
      %p117 = scmp.ne.s32.totalorder %s112, %s114
      %p118 = scmp.eq.s32.totalorder %s15, 0
      %p119 = por %p117, %p118
      %p120 = scmp.ne.s32.totalorder %s112, %s114
      %p121 = scmp.eq.s32.totalorder %s20, 1
      %p122 = por %p120, %p121
      %p123 = scmp.ne.s32.totalorder %s114, %s115
      %p124 = scmp.eq.s32.totalorder %s20, 0
      %p125 = por %p123, %p124
      %p126 = scmp.ne.s32.totalorder %s114, %s115
      %p127 = scmp.eq.s32.totalorder %s21, 1
      %p128 = por %p126, %p127
      %p130 = scmp.ne.s32.totalorder %s115, %s129
      %p131 = scmp.eq.s32.totalorder %s21, 0
      %p132 = por %p130, %p131
      %s133 = ssub.s32 %s15, %s22
      %p134 = scmp.eq.s32.totalorder %s133, 0
      %s136 = sadd.s32 %s135, 1
      %s137 = scalar_select %p134, %s135, %s136
      %p140 = pneg %p134
      %p141 = scmp.eq.s32.totalorder %s15, 1
      %p142 = por %p140, %p141
      %p143 = scmp.ne.s32.totalorder %s135, %s138
      %p144 = scmp.eq.s32.totalorder %s15, 0
      %p145 = por %p143, %p144
      %p146 = scmp.ne.s32.totalorder %s135, %s138
      %p147 = scmp.eq.s32.totalorder %s20, 1
      %p148 = por %p146, %p147
      %p149 = scmp.ne.s32.totalorder %s138, %s139
      %p150 = scmp.eq.s32.totalorder %s20, 0
      %p151 = por %p149, %p150
      %p152 = scmp.ne.s32.totalorder %s138, %s139
      %p153 = scmp.eq.s32.totalorder %s21, 1
      %p154 = por %p152, %p153
      %p156 = scmp.ne.s32.totalorder %s139, %s155
      %p157 = scmp.eq.s32.totalorder %s21, 0
      %p158 = por %p156, %p157
      %p159 = scmp.le.s32.totalorder 1, %s15
      %p160 = scmp.lt.s32.totalorder %s15, 3
      %p161 = pnand %p159, %p160
      %p162 = pneg %p161
      // Predicated region
      $region9: #{tpu_custom_call.1} parent=5 // pred_check
        _
      $region10: #{tpu_custom_call.1} parent=5 // pred_check_branch
        %164 = sbr.rel (%p161) target = $region12
      $region11: #{tpu_custom_call.1} parent=5 // pred_region
        %s165 = ssub.s32 %s15, 1
        // Predicated region
        $region13: #{tpu_custom_call.1} parent=11 // pred_check
          %p166 = pneg %p62
        $region14: #{tpu_custom_call.1} parent=11 // pred_check_branch
          %168 = sbr.rel (%p166) target = $region16
        $region15: #{tpu_custom_call.1} parent=11 // pred_region
          _
        $region16: #{tpu_custom_call.1} parent=11 // pred_fallthru
          _
        // Predicated region
        $region17: #{tpu_custom_call.1} parent=11 // pred_check
          %p169 = pneg %p83
        $region18: #{tpu_custom_call.1} parent=11 // pred_check_branch
          %171 = sbr.rel (%p169) target = $region20
        $region19: #{tpu_custom_call.1} parent=11 // pred_region
          _
        $region20: #{tpu_custom_call.1} parent=11 // pred_fallthru
          _
        // Predicated region
        $region21: #{tpu_custom_call.1} parent=11 // pred_check
          %p172 = pneg %p104
        $region22: #{tpu_custom_call.1} parent=11 // pred_check_branch
          %174 = sbr.rel (%p172) target = $region24
        $region23: #{tpu_custom_call.1} parent=11 // pred_region
          _
        $region24: #{tpu_custom_call.1} parent=11 // pred_fallthru
          _
        // Predicated region
        $region25: #{tpu_custom_call.1} parent=11 // pred_check
          %p175 = pneg %p125
        $region26: #{tpu_custom_call.1} parent=11 // pred_check_branch
          %177 = sbr.rel (%p175) target = $region28
        $region27: #{tpu_custom_call.1} parent=11 // pred_region
          %179 = vsyncadd [#allocation6], 0
          %s181 = sshll.u32 %s4, 4
          %s182 = int_to_ptr.hbm [resolvable:$true] %s181
          %s183 = sshll.u32 [#allocation5], 4
          %s184 = int_to_ptr.vmem [resolvable:$true] %s183
          %186 = dma.hbm_to_vmem [thread:$0]  %s182, 128, %s184, [#allocation6]
        $region28: #{tpu_custom_call.1} parent=11 // pred_fallthru
          _
      $region12: #{tpu_custom_call.1} parent=5 // pred_fallthru
        _
      %p187 = scmp.lt.s32.totalorder %s15, 2
      // Predicated region
      $region29: #{tpu_custom_call.1} parent=5 // pred_check
        %p188 = pneg %p187
      $region30: #{tpu_custom_call.1} parent=5 // pred_check_branch
        %190 = sbr.rel (%p188) target = $region32
      $region31: #{tpu_custom_call.1} parent=5 // pred_region
        // Predicated region
        $region33: #{tpu_custom_call.1} parent=31 // pred_check
          %p191 = pneg %p35
        $region34: #{tpu_custom_call.1} parent=31 // pred_check_branch
          %193 = sbr.rel (%p191) target = $region36
        $region35: #{tpu_custom_call.1} parent=31 // pred_region
          %s194 = sand.u32 %s25, 1
          %s195 = scalar_lea.sflag [#allocation4], %s194
          %s196 = sand.u32 %s25, 1
          %s197 = smul.addr %s196, 8
          %s198 = scalar_lea.vmem [#allocation3], %s197
          %200 = vsyncadd %s195, 0
          %s201 = smul.addr %s15, 2
          %s202 = smul.addr %s201, 4
          %s203 = scalar_lea.hbm %s0, %s202
          %s205 = sshll.u32 %s203, 4
          %s206 = int_to_ptr.hbm [resolvable:$true] %s205
          %s207 = sshll.u32 %s198, 4
          %s208 = int_to_ptr.vmem [resolvable:$true] %s207
          %210 = dma.hbm_to_vmem [thread:$0]  %s206, 128, %s208, %s195
        $region36: #{tpu_custom_call.1} parent=31 // pred_fallthru
          _
      $region32: #{tpu_custom_call.1} parent=5 // pred_fallthru
        _
      %p211 = scmp.le.s32.totalorder 1, %s15
      %p212 = scmp.lt.s32.totalorder %s15, 3
      %p213 = pnand %p211, %p212
      %p214 = pneg %p213
      // Predicated region
      $region37: #{tpu_custom_call.1} parent=5 // pred_check
        _
      $region38: #{tpu_custom_call.1} parent=5 // pred_check_branch
        %216 = sbr.rel (%p213) target = $region40
      $region39: #{tpu_custom_call.1} parent=5 // pred_region
        %s217 = ssub.s32 %s15, 1
        %s218 = sand.u32 %s28, 1
        %s219 = scalar_lea.sflag [#allocation4], %s218
        %s220 = sand.u32 %s28, 1
        %s221 = smul.addr %s220, 8
        %s222 = scalar_lea.vmem [#allocation3], %s221
        // Predicated region
        $region41: #{tpu_custom_call.1} parent=39 // pred_check
          %p223 = pneg %p41
        $region42: #{tpu_custom_call.1} parent=39 // pred_check_branch
          %225 = sbr.rel (%p223) target = $region44
        $region43: #{tpu_custom_call.1} parent=39 // pred_region
          %227 = dma.done %s219, 128
        $region44: #{tpu_custom_call.1} parent=39 // pred_fallthru
          _
        // Predicated region
        $region45: #{tpu_custom_call.1} parent=39 // pred_check
          %p228 = pneg %p125
        $region46: #{tpu_custom_call.1} parent=39 // pred_check_branch
          %230 = sbr.rel (%p228) target = $region48
        $region47: #{tpu_custom_call.1} parent=39 // pred_region
          %232 = dma.done [#allocation6], 128
        $region48: #{tpu_custom_call.1} parent=39 // pred_fallthru
          _
        %s233 = sand.u32 %s28, 1
        %s234 = scalar_lea.sflag [#allocation4], %s233
        %s235 = sand.u32 %s28, 1
        %s236 = smul.addr %s235, 8
        %s237 = scalar_lea.vmem [#allocation3], %s236
        %p238 = pneg %p41
        %p239 = pneg %p38
        %p240 = pneg %p62
        %p241 = pneg %p59
        %p242 = pneg %p83
        %p243 = pneg %p80
        %p244 = pneg %p104
        %p245 = pneg %p101
        %p246 = pneg %p125
        %p247 = pneg %p122
        %p248 = pneg %p151
        %p249 = pneg %p148
        %p250 = scmp.lt.s32.totalorder %s20, 1
        %s251 = scalar_select %p250, %s20, 1
        %s252 = smul.addr %s251, 4
        %s253 = smul.addr %s252, 8
        %s254 = scalar_lea.vmem %s5, %s253
        %p255 = scmp.lt.s32.totalorder %s20, 1
        %s256 = scalar_select %p255, %s20, 1
        %s257 = smul.addr %s256, 4
        %s258 = smul.addr %s257, 8
        %s259 = scalar_lea.vmem %s5, %s258
        %v260 = vld [vmem:[%s222] sm:$0xff]
        %v261 = vld [vmem:[%s1] sm:$0xf]
        %263 = vset.pattern.permute.xlu0 0
        %264 = vperm.xlu0 %263, %v261
        %v265 = vpop.permute.xlu0 %264
        %v267 = vunpack.c.l.s4 839922192
        %v268 = vunpack.c.0.s8 %v267
        %v269 = vperm.slane %v265, %v268
        %v271 = vmul.f32 %v260, %v269
        %v272 = vld [vmem:[%s2] sm:$0xf]
        %274 = vset.pattern.permute.xlu0 0
        %275 = vperm.xlu0 %274, %v272
        %v276 = vpop.permute.xlu0 %275
        %v278 = vunpack.c.l.s4 839922192
        %v279 = vunpack.c.0.s8 %v278
        %v280 = vperm.slane %v276, %v279
        %v282 = vadd.f32 %v271, %v280
        %v283 = vmax.f32 %v282, 0.0
        %285 = vst [vmem:[#allocation1] ss:$2 sm:$0xff] %v283
        %v286 = vld.sshfl [vmem:[#allocation1] sm:$0xff pattern:$0x75316420]
        %v287 = vld.sshfl [vmem:[#allocation1 + $0x8] sm:$0xff pattern:$0x75316420]
        %vm290 = vcmask 1043456
        %v291 = vsel %vm290, %v286, 0.0
        %v292 = vsel %vm290, %v287, 0.0
        %295 = vrot.lane.b32.xlu0 %v291, 17
        %v296 = vpop.permute.xlu0 %295
        %297 = vrot.lane.b32.xlu0 %v292, 17
        %v298 = vpop.permute.xlu0 %297
        %vm299 = vcmask 138240
        %v300 = vsel %vm299, %v296, %v298
        %v304 = vsel %vm299, 0.0, %v296
        %v305 = vsel %vm299, %v298, 0.0
        %306 = vst [vmem:[#allocation2] sm:$0xff] %v304
        %307 = vst [vmem:[#allocation2 + $0x8] sm:$0xff] %v300
        %vm308 = vcmask 277504
        %309 = vst.msk [vmem:[#allocation2 + $0x10] sm:$0xff] %vm308, %v305
        %v310 = vld [vmem:[#allocation2] sm:$0xff]
        %v311 = vld [vmem:[#allocation2 + $0x8] sm:$0xff]
        %v312 = vld [vmem:[#allocation5] ss:$4 sm:$0x3]
        %v314 = vperm.slane %v312, 0
        %v315 = vperm.slane %v312, 1
        %v318 = vmul.f32 %v310, %v314
        %v319 = vmul.f32 %v311, %v315
        %v320 = vld [vmem:[#allocation2 + $0x10] sm:$0xff]
        %s321 = scalar_lea.vmem [#allocation5], 1
        %v322 = vld [vmem:[%s321] ss:$4 sm:$0x3]
        %v324 = vperm.slane %v322, 0
        %v325 = vperm.slane %v322, 1
        %326 = vrot.lane.b32.xlu0 %v324, 1
        %v327 = vpop.permute.xlu0 %326
        %328 = vrot.lane.b32.xlu0 %v325, 1
        %v329 = vpop.permute.xlu0 %328
        %vm330 = vcmask 7168
        %v331 = vsel %vm330, %v327, %v329
        %v335 = vmul.f32 %v310, %v327
        %v336 = vmul.f32 %v311, %v331
        %v337 = vmul.f32 %v320, %v329
        %s338 = scalar_lea.vmem [#allocation5], 2
        %v339 = vld [vmem:[%s338] ss:$4 sm:$0x3]
        %v341 = vperm.slane %v339, 0
        %v342 = vperm.slane %v339, 1
        %343 = vrot.lane.b32.xlu0 %v341, 2
        %v344 = vpop.permute.xlu0 %343
        %345 = vrot.lane.b32.xlu0 %v342, 2
        %v346 = vpop.permute.xlu0 %345
        %vm347 = vcmask 15360
        %v348 = vsel %vm347, %v344, %v346
        %v352 = vmul.f32 %v310, %v344
        %v353 = vmul.f32 %v311, %v348
        %v354 = vmul.f32 %v320, %v346
        %355 = vrot.lane.b32.xlu0 %v314, 16
        %v356 = vpop.permute.xlu0 %355
        %357 = vrot.lane.b32.xlu0 %v315, 16
        %v358 = vpop.permute.xlu0 %357
        %vm359 = vcmask 130048
        %v360 = vsel %vm359, %v356, %v358
        %v364 = vmul.f32 %v310, %v356
        %v365 = vmul.f32 %v311, %v360
        %v366 = vmul.f32 %v320, %v358
        %367 = vrot.lane.b32.xlu0 %v324, 17
        %v368 = vpop.permute.xlu0 %367
        %369 = vrot.lane.b32.xlu0 %v325, 17
        %v370 = vpop.permute.xlu0 %369
        %v371 = vsel %vm299, %v368, %v370
        %v375 = vmul.f32 %v310, %v368
        %v376 = vmul.f32 %v311, %v371
        %v377 = vmul.f32 %v320, %v370
        %378 = vrot.lane.b32.xlu0 %v341, 18
        %v379 = vpop.permute.xlu0 %378
        %380 = vrot.lane.b32.xlu0 %v342, 18
        %v381 = vpop.permute.xlu0 %380
        %vm382 = vcmask 146432
        %v383 = vsel %vm382, %v379, %v381
        %v387 = vmul.f32 %v310, %v379
        %v388 = vmul.f32 %v311, %v383
        %v389 = vmul.f32 %v320, %v381
        %390 = vrot.lane.b32.xlu0 %v314, 32
        %v391 = vpop.permute.xlu0 %390
        %392 = vrot.lane.b32.xlu0 %v315, 32
        %v393 = vpop.permute.xlu0 %392
        %vm394 = vcmask 261120
        %v395 = vsel %vm394, %v391, %v393
        %v399 = vmul.f32 %v310, %v391
        %v400 = vmul.f32 %v311, %v395
        %v401 = vmul.f32 %v320, %v393
        %402 = vrot.lane.b32.xlu0 %v324, 33
        %v403 = vpop.permute.xlu0 %402
        %404 = vrot.lane.b32.xlu0 %v325, 33
        %v405 = vpop.permute.xlu0 %404
        %vm406 = vcmask 269312
        %v407 = vsel %vm406, %v403, %v405
        %v411 = vmul.f32 %v310, %v403
        %v412 = vmul.f32 %v311, %v407
        %v413 = vmul.f32 %v320, %v405
        %414 = vrot.lane.b32.xlu0 %v341, 34
        %v415 = vpop.permute.xlu0 %414
        %416 = vrot.lane.b32.xlu0 %v342, 34
        %v417 = vpop.permute.xlu0 %416
        %v418 = vsel %vm308, %v415, %v417
        %v422 = vmul.f32 %v310, %v415
        %v423 = vmul.f32 %v311, %v418
        %v424 = vmul.f32 %v320, %v417
        %428 = vrot.lane.b32.xlu0 %v335, 127
        %v429 = vpop.permute.xlu0 %428
        %430 = vrot.lane.b32.xlu0 %v336, 127
        %v431 = vpop.permute.xlu0 %430
        %432 = vrot.lane.b32.xlu0 %v337, 127
        %v433 = vpop.permute.xlu0 %432
        %vm434 = vcmask 1039360
        %v435 = vsel %vm434, %v429, %v431
        %v436 = vsel %vm434, %v431, %v433
        %442 = vrot.lane.b32.xlu0 %v352, 126
        %v443 = vpop.permute.xlu0 %442
        %444 = vrot.lane.b32.xlu0 %v353, 126
        %v445 = vpop.permute.xlu0 %444
        %446 = vrot.lane.b32.xlu0 %v354, 126
        %v447 = vpop.permute.xlu0 %446
        %vm448 = vcmask 1031168
        %v449 = vsel %vm448, %v443, %v445
        %v450 = vsel %vm448, %v445, %v447
        %456 = vrot.lane.b32.xlu0 %v364, 112
        %v457 = vpop.permute.xlu0 %456
        %458 = vrot.lane.b32.xlu0 %v365, 112
        %v459 = vpop.permute.xlu0 %458
        %460 = vrot.lane.b32.xlu0 %v366, 112
        %v461 = vpop.permute.xlu0 %460
        %vm462 = vcmask 916480
        %v463 = vsel %vm462, %v457, %v459
        %v464 = vsel %vm462, %v459, %v461
        %470 = vrot.lane.b32.xlu0 %v375, 111
        %v471 = vpop.permute.xlu0 %470
        %472 = vrot.lane.b32.xlu0 %v376, 111
        %v473 = vpop.permute.xlu0 %472
        %474 = vrot.lane.b32.xlu0 %v377, 111
        %v475 = vpop.permute.xlu0 %474
        %vm476 = vcmask 908288
        %v477 = vsel %vm476, %v471, %v473
        %v478 = vsel %vm476, %v473, %v475
        %484 = vrot.lane.b32.xlu0 %v387, 110
        %v485 = vpop.permute.xlu0 %484
        %486 = vrot.lane.b32.xlu0 %v388, 110
        %v487 = vpop.permute.xlu0 %486
        %488 = vrot.lane.b32.xlu0 %v389, 110
        %v489 = vpop.permute.xlu0 %488
        %vm490 = vcmask 900096
        %v491 = vsel %vm490, %v485, %v487
        %v492 = vsel %vm490, %v487, %v489
        %498 = vrot.lane.b32.xlu0 %v399, 96
        %v499 = vpop.permute.xlu0 %498
        %500 = vrot.lane.b32.xlu0 %v400, 96
        %v501 = vpop.permute.xlu0 %500
        %502 = vrot.lane.b32.xlu0 %v401, 96
        %v503 = vpop.permute.xlu0 %502
        %vm504 = vcmask 785408
        %v505 = vsel %vm504, %v499, %v501
        %v506 = vsel %vm504, %v501, %v503
        %512 = vrot.lane.b32.xlu0 %v411, 95
        %v513 = vpop.permute.xlu0 %512
        %514 = vrot.lane.b32.xlu0 %v412, 95
        %v515 = vpop.permute.xlu0 %514
        %516 = vrot.lane.b32.xlu0 %v413, 95
        %v517 = vpop.permute.xlu0 %516
        %vm518 = vcmask 777216
        %v519 = vsel %vm518, %v513, %v515
        %v520 = vsel %vm518, %v515, %v517
        %526 = vrot.lane.b32.xlu0 %v422, 94
        %v527 = vpop.permute.xlu0 %526
        %528 = vrot.lane.b32.xlu0 %v423, 94
        %v529 = vpop.permute.xlu0 %528
        %530 = vrot.lane.b32.xlu0 %v424, 94
        %v531 = vpop.permute.xlu0 %530
        %vm532 = vcmask 769024
        %v533 = vsel %vm532, %v527, %v529
        %v534 = vsel %vm532, %v529, %v531
        %v537 = vld [vmem:[%s3] sm:$0xff]
        %vm538 = vcmask 588800
        %v540 = vsel %vm538, %v537, 0
        %542 = vmatpush.msra.mxu0 0.0
        %543 = vmatpush.msra.mxu0 0.0
        %544 = vmatpush.msra.mxu0 0.0
        %545 = vmatpush.msra.mxu0 0.0
        %546 = vmatpush.msra.mxu0 0.0
        %547 = vmatpush.msra.mxu0 0.0
        %548 = vmatpush.msra.mxu0 0.0
        %549 = vmatpush.msra.mxu0 %v533
        %550 = vmatpush.msra.mxu0 %v519
        %551 = vmatpush.msra.mxu0 %v505
        %552 = vmatpush.msra.mxu0 %v491
        %553 = vmatpush.msra.mxu0 %v477
        %554 = vmatpush.msra.mxu0 %v463
        %555 = vmatpush.msra.mxu0 %v449
        %556 = vmatpush.msra.mxu0 %v435
        %557 = vmatpush.msra.mxu0 %v318
        %558 = vmatmul.f32.gmra.mxu0 %v540
        %v559 = vpop.f32.mrf.mxu0
        %v560 = vadd.f32 0.0, %v559
        %561 = vdwg.mxu0
        %562 = vmatpush.msra.mxu0 0.0
        %563 = vmatpush.msra.mxu0 0.0
        %564 = vmatpush.msra.mxu0 0.0
        %565 = vmatpush.msra.mxu0 0.0
        %566 = vmatpush.msra.mxu0 0.0
        %567 = vmatpush.msra.mxu0 0.0
        %568 = vmatpush.msra.mxu0 0.0
        %569 = vmatpush.msra.mxu0 %v534
        %570 = vmatpush.msra.mxu0 %v520
        %571 = vmatpush.msra.mxu0 %v506
        %572 = vmatpush.msra.mxu0 %v492
        %573 = vmatpush.msra.mxu0 %v478
        %574 = vmatpush.msra.mxu0 %v464
        %575 = vmatpush.msra.mxu0 %v450
        %576 = vmatpush.msra.mxu0 %v436
        %577 = vmatpush.msra.mxu0 %v319
        %578 = vmatmul.f32.gmra.mxu0 %v540
        %v579 = vpop.f32.mrf.mxu0
        %v580 = vadd.f32 0.0, %v579
        %581 = vdwg.mxu0
        %583 = vst [vmem:[#allocation1] ss:$2 sm:$0xff] %v260
        %v584 = vld.sshfl [vmem:[#allocation1] sm:$0xff pattern:$0x75316420]
        %v585 = vld.sshfl [vmem:[#allocation1 + $0x8] sm:$0xff pattern:$0x75316420]
        %v590 = vrot.slane %v560, 4
        %v591 = vrot.slane %v580, 4
        %v594 = vsel %vm290, %v584, %v590
        %v595 = vsel %vm290, %v585, %v591
        %596 = vst [vmem:[%s259] sm:$0xff] %v594
        %597 = vst [vmem:[%s259 + $0x8] sm:$0xff] %v595
        %598 = vst [vmem:[%s259 + $0x10] sm:$0xf] %v590
        %599 = vst [vmem:[%s259 + $0x18] sm:$0xf] %v591
        %p600 = scmp.lt.s32.totalorder %s20, 1
        %s601 = scalar_select %p600, %s20, 1
        %s602 = smul.addr %s601, 4
        %s603 = smul.addr %s602, 8
        %s604 = scalar_lea.vmem %s5, %s603
        // Predicated region
        $region49: #{tpu_custom_call.1} parent=39 // pred_check
          %p605 = pneg %p148
        $region50: #{tpu_custom_call.1} parent=39 // pred_check_branch
          %607 = sbr.rel (%p605) target = $region52
        $region51: #{tpu_custom_call.1} parent=39 // pred_region
          _
        $region52: #{tpu_custom_call.1} parent=39 // pred_fallthru
          _
      $region40: #{tpu_custom_call.1} parent=5 // pred_fallthru
        _
      %p608 = scmp.le.s32.totalorder 2, %s15
      // Predicated region
      $region53: #{tpu_custom_call.1} parent=5 // pred_check
        %p609 = pneg %p608
      $region54: #{tpu_custom_call.1} parent=5 // pred_check_branch
        %611 = sbr.rel (%p609) target = $region56
      $region55: #{tpu_custom_call.1} parent=5 // pred_region
        %s612 = ssub.s32 %s15, 2
        // Predicated region
        $region57: #{tpu_custom_call.1} parent=55 // pred_check
          %p613 = pneg %p154
        $region58: #{tpu_custom_call.1} parent=55 // pred_check_branch
          %615 = sbr.rel (%p613) target = $region60
        $region59: #{tpu_custom_call.1} parent=55 // pred_region
          %p616 = scmp.lt.s32.totalorder %s21, 1
          %s617 = scalar_select %p616, %s21, 1
          %s618 = smul.addr %s617, 4
          %s619 = smul.addr %s618, 8
          %s620 = scalar_lea.vmem %s5, %s619
        $region60: #{tpu_custom_call.1} parent=55 // pred_fallthru
          _
      $region56: #{tpu_custom_call.1} parent=5 // pred_fallthru
        _
    $region6: #{tpu_custom_call.1} parent=1 // loop_footer
      %s19 = sadd.s32 1, %s15
    $region7: #{tpu_custom_call.1} parent=1 // loop_footer_branch
      %14 = sbr.rel target = $region3
    $region8: #{tpu_custom_call.1} parent=1 // loop_exit
      _
    %621 = vsyncpa [#allocation4], 1
    %s622 = scalar_lea.sflag [#allocation4], 1
    %623 = vsyncpa %s622, 1
    %624 = vsyncpa [#allocation6], 1

</llo_original>
